<compile_context>
chip_gen: v5e
topology: v5e:2x2
jax: 0.10.0
libtpu: 0.0.40
codegen_flags: <defaults>
</compile_context>

<pallas_src>
import functools

import jax
import jax.numpy as jnp
from jax.experimental import pallas as pl
from jax.experimental.pallas import tpu as pltpu

# ---- model config (small, consistent with the module's forward) -----------
B = 2        # logical batch
BP = 8       # padded batch (fills the 8 vreg sublanes)
T = 8        # sequence length (max_seq_length after padding)
I = 64       # input_size  (word-embedding dim; 300 -> pad to 384 in real model)
H = 32       # hidden_size
O = 5        # logical output_size (TripAdvisor rating classes)
OP = 128     # padded output width (lane-dense store)
L = 2        # nb_layers


def rnn_kernel(x_ref,          # (T*BP, I)  time-major, batch-flattened input
               wih0_ref,       # (I, H)
               whh0_ref,       # (H, H)
               b0_ref,         # (1, H)     bih0 + bhh0
               wcat1_ref,      # (2H, H)    vstack(Wih1^T, Whh1^T)
               b1_ref,         # (1, H)     bih1 + bhh1
               wlin_ref,       # (H, OP)    zero-padded linear weight
               blin_ref,       # (1, OP)    zero-padded linear bias
               logits_ref,     # (BP, OP)
               hidden_ref):    # (L, BP, H)
    """Whole 2-layer tanh RNN + linear head in one kernel invocation.

    PyTorch nn.RNN semantics (zero initial hidden):
      h_l[t] = tanh(in_l[t] @ Wih_l^T + b_ih_l + h_l[t-1] @ Whh_l^T + b_hh_l)
    """
    # Layer-0 input projection for ALL timesteps in one MXU matmul.
    xw0 = jnp.dot(x_ref[...], wih0_ref[...],
                  preferred_element_type=jnp.float32) + b0_ref[...]   # (T*BP, H)

    whh0 = whh0_ref[...]
    wcat1 = wcat1_ref[...]
    b1 = b1_ref[...]

    h0 = jnp.zeros((BP, H), jnp.float32)
    h1 = jnp.zeros((BP, H), jnp.float32)

    # Fully unrolled static recurrence (T is small and static).
    for t in range(T):
        h0 = jnp.tanh(
            xw0[t * BP:(t + 1) * BP, :]
            + jnp.dot(h0, whh0, preferred_element_type=jnp.float32))
        # Fused layer-1 matmul: [h0 | h1_prev] @ [Wih1^T ; Whh1^T]
        h1 = jnp.tanh(
            jnp.dot(jnp.concatenate([h0, h1], axis=-1), wcat1,
                    preferred_element_type=jnp.float32) + b1)

    # Linear head on the last timestep of the top layer (lane-dense output).
    logits_ref[...] = (
        jnp.dot(h1, wlin_ref[...], preferred_element_type=jnp.float32)
        + blin_ref[...])
    hidden_ref[0] = h0
    hidden_ref[1] = h1


@jax.jit
def rnn_forward(x_btd, params):
    """x_btd: (B, T, I) batch_first, like the PyTorch module.

    Returns (logits (B, O), hidden (L, B, H))."""
    (wih0, whh0, bih0, bhh0,
     wih1, whh1, bih1, bhh1,
     wlin, blin) = params

    # Pad batch to BP, go time-major, flatten (T, BP) -> T*BP rows.
    x_pad = jnp.zeros((BP, T, I), jnp.float32).at[:B].set(x_btd)
    x_tb = jnp.transpose(x_pad, (1, 0, 2)).reshape(T * BP, I)

    # Weight prep: pre-transpose (PyTorch stores (out, in)), pre-sum biases,
    # fuse layer-1 weights, pad the linear head to 128 output lanes.
    wih0_t = wih0.T                                             # (I, H)
    whh0_t = whh0.T                                             # (H, H)
    b0 = (bih0 + bhh0).reshape(1, H)
    wcat1 = jnp.concatenate([wih1.T, whh1.T], axis=0)           # (2H, H)
    b1 = (bih1 + bhh1).reshape(1, H)
    wlin_pad = jnp.zeros((H, OP), jnp.float32).at[:, :O].set(wlin.T)
    blin_pad = jnp.zeros((1, OP), jnp.float32).at[:, :O].set(blin.reshape(1, O))

    full = lambda shape: pl.BlockSpec(shape, lambda i, _s=shape: (0,) * len(_s))

    grid_spec = pltpu.PrefetchScalarGridSpec(
        num_scalar_prefetch=0,
        grid=(1,),
        in_specs=[
            full((T * BP, I)),                     # x (single full-block DMA)
            full((I, H)), full((H, H)), full((1, H)),   # layer 0
            full((2 * H, H)), full((1, H)),             # layer 1 (fused)
            full((H, OP)), full((1, OP)),               # linear head
        ],
        out_specs=[
            full((BP, OP)),                        # padded logits
            full((L, BP, H)),                      # final hidden
        ],
    )

    logits_pad, hidden_pad = pl.pallas_call(
        rnn_kernel,
        grid_spec=grid_spec,
        out_shape=(
            jax.ShapeDtypeStruct((BP, OP), jnp.float32),
            jax.ShapeDtypeStruct((L, BP, H), jnp.float32),
        ),
        compiler_params=pltpu.CompilerParams(
            dimension_semantics=("arbitrary",)),
    )(x_tb, wih0_t, whh0_t, b0, wcat1, b1, wlin_pad, blin_pad)

    logits = logits_pad[:B, :O]
    hidden = hidden_pad[:, :B, :]
    return logits, hidden


def rnn_reference(x_btd, params):
    """Plain-JAX reference matching PyTorch nn.RNN + nn.Linear semantics."""
    (wih0, whh0, bih0, bhh0,
     wih1, whh1, bih1, bhh1,
     wlin, blin) = params
    h0 = jnp.zeros((B, H), jnp.float32)
    h1 = jnp.zeros((B, H), jnp.float32)
    for t in range(T):
        x_t = x_btd[:, t, :]
        h0 = jnp.tanh(x_t @ wih0.T + bih0 + h0 @ whh0.T + bhh0)
        h1 = jnp.tanh(h0 @ wih1.T + bih1 + h1 @ whh1.T + bhh1)
    logits = h1 @ wlin.T + blin
    hidden = jnp.stack([h0, h1], axis=0)
    return logits, hidden


def init_params(key):
    """Deterministic init mimicking PyTorch defaults: U(-1/sqrt(H), 1/sqrt(H))."""
    k = 1.0 / jnp.sqrt(jnp.float32(H))
    keys = jax.random.split(key, 10)
    u = lambda kk, shape: jax.random.uniform(kk, shape, jnp.float32, -k, k)
    wih0 = u(keys[0], (H, I))
    whh0 = u(keys[1], (H, H))
    bih0 = u(keys[2], (H,))
    bhh0 = u(keys[3], (H,))
    wih1 = u(keys[4], (H, H))
    whh1 = u(keys[5], (H, H))
    bih1 = u(keys[6], (H,))
    bhh1 = u(keys[7], (H,))
    wlin = u(keys[8], (O, H))
    blin = u(keys[9], (O,))
    return (wih0, whh0, bih0, bhh0, wih1, whh1, bih1, bhh1, wlin, blin)


if __name__ == "__main__":
    root = jax.random.PRNGKey(0)
    k_x, k_p = jax.random.split(root)

    # x plays the role of embedding_layer(...) output: (batch, seq, embed_dim)
    x = jax.random.normal(k_x, (B, T, I), jnp.float32)
    params = init_params(k_p)

    logits, hidden = rnn_forward(x, params)
    jax.block_until_ready((logits, hidden))

    ref_logits, ref_hidden = rnn_reference(x, params)
    assert jnp.allclose(logits, ref_logits, atol=1e-4, rtol=1e-4)
    assert jnp.allclose(hidden, ref_hidden, atol=1e-4, rtol=1e-4)

    print("KERNEL_OK")
</pallas_src>

<mosaic_0001>
module attributes {stable_mosaic.version = 11 : i64} {
  func.func @rnn_kernel(%arg0: i32, %arg1: memref<64x64xf32, #tpu.memory_space<vmem>>, %arg2: memref<64x32xf32, #tpu.memory_space<vmem>>, %arg3: memref<32x32xf32, #tpu.memory_space<vmem>>, %arg4: memref<1x32xf32, #tpu.memory_space<vmem>>, %arg5: memref<64x32xf32, #tpu.memory_space<vmem>>, %arg6: memref<1x32xf32, #tpu.memory_space<vmem>>, %arg7: memref<32x128xf32, #tpu.memory_space<vmem>>, %arg8: memref<1x128xf32, #tpu.memory_space<vmem>>, %arg9: memref<8x128xf32, #tpu.memory_space<vmem>>, %arg10: memref<2x8x32xf32, #tpu.memory_space<vmem>>) attributes {dimension_semantics = [#tpu.dimension_semantics<arbitrary>], iteration_bounds = array<i64: 1>, scalar_prefetch = 0 : i64, scratch_operands = 0 : i64, tpu.core_type = #tpu.core_type<tc>, window_params = [{pipeline_mode = #tpu.pipeline_mode<synchronous>, transform_indices = @transform_0, window_bounds = array<i64: 64, 64>}, {pipeline_mode = #tpu.pipeline_mode<synchronous>, transform_indices = @transform_1, window_bounds = array<i64: 64, 32>}, {pipeline_mode = #tpu.pipeline_mode<synchronous>, transform_indices = @transform_2, window_bounds = array<i64: 32, 32>}, {pipeline_mode = #tpu.pipeline_mode<synchronous>, transform_indices = @transform_3, window_bounds = array<i64: 1, 32>}, {pipeline_mode = #tpu.pipeline_mode<synchronous>, transform_indices = @transform_4, window_bounds = array<i64: 64, 32>}, {pipeline_mode = #tpu.pipeline_mode<synchronous>, transform_indices = @transform_5, window_bounds = array<i64: 1, 32>}, {pipeline_mode = #tpu.pipeline_mode<synchronous>, transform_indices = @transform_6, window_bounds = array<i64: 32, 128>}, {pipeline_mode = #tpu.pipeline_mode<synchronous>, transform_indices = @transform_7, window_bounds = array<i64: 1, 128>}, {pipeline_mode = #tpu.pipeline_mode<synchronous>, transform_indices = @transform_8, window_bounds = array<i64: 8, 128>}, {pipeline_mode = #tpu.pipeline_mode<synchronous>, transform_indices = @transform_9, window_bounds = array<i64: 2, 8, 32>}]} {
    %c0 = arith.constant 0 : index
    %c0_0 = arith.constant 0 : index
    %0 = vector.load %arg1[%c0, %c0_0] : memref<64x64xf32, #tpu.memory_space<vmem>>, vector<64x64xf32>
    %c0_1 = arith.constant 0 : index
    %c0_2 = arith.constant 0 : index
    %1 = vector.load %arg2[%c0_1, %c0_2] : memref<64x32xf32, #tpu.memory_space<vmem>>, vector<64x32xf32>
    %cst = arith.constant dense<0.000000e+00> : vector<64x32xf32>
    %2 = tpu.matmul %0, %1, %cst {dimension_numbers = #tpu.dot_dimension_numbers<[1], [0], [0], [1], [0, 0, 1, 1], [], []>} : vector<64x64xf32>, vector<64x32xf32>, vector<64x32xf32> -> vector<64x32xf32>
    %c0_3 = arith.constant 0 : index
    %c0_4 = arith.constant 0 : index
    %3 = vector.load %arg4[%c0_3, %c0_4] : memref<1x32xf32, #tpu.memory_space<vmem>>, vector<1x32xf32>
    %4 = vector.broadcast %3 : vector<1x32xf32> to vector<64x32xf32>
    %5 = arith.addf %2, %4 : vector<64x32xf32>
    %c0_5 = arith.constant 0 : index
    %c0_6 = arith.constant 0 : index
    %6 = vector.load %arg3[%c0_5, %c0_6] : memref<32x32xf32, #tpu.memory_space<vmem>>, vector<32x32xf32>
    %c0_7 = arith.constant 0 : index
    %c0_8 = arith.constant 0 : index
    %7 = vector.load %arg5[%c0_7, %c0_8] : memref<64x32xf32, #tpu.memory_space<vmem>>, vector<64x32xf32>
    %c0_9 = arith.constant 0 : index
    %c0_10 = arith.constant 0 : index
    %8 = vector.load %arg6[%c0_9, %c0_10] : memref<1x32xf32, #tpu.memory_space<vmem>>, vector<1x32xf32>
    %cst_11 = arith.constant 0.000000e+00 : f32
    %9 = vector.broadcast %cst_11 : f32 to vector<8x32xf32>
    %cst_12 = arith.constant 0.000000e+00 : f32
    %10 = vector.broadcast %cst_12 : f32 to vector<8x32xf32>
    %11 = vector.extract_strided_slice %5 {offsets = [0, 0], sizes = [8, 32], strides = [1, 1]} : vector<64x32xf32> to vector<8x32xf32>
    %cst_13 = arith.constant dense<0.000000e+00> : vector<8x32xf32>
    %12 = tpu.matmul %9, %6, %cst_13 {dimension_numbers = #tpu.dot_dimension_numbers<[1], [0], [0], [1], [0, 0, 1, 1], [], []>} : vector<8x32xf32>, vector<32x32xf32>, vector<8x32xf32> -> vector<8x32xf32>
    %13 = arith.addf %11, %12 : vector<8x32xf32>
    %14 = math.tanh %13 : vector<8x32xf32>
    %15 = tpu.concatenate %14, %10 in 1 : vector<8x32xf32>, vector<8x32xf32> -> vector<8x64xf32>
    %cst_14 = arith.constant dense<0.000000e+00> : vector<8x32xf32>
    %16 = tpu.matmul %15, %7, %cst_14 {dimension_numbers = #tpu.dot_dimension_numbers<[1], [0], [0], [1], [0, 0, 1, 1], [], []>} : vector<8x64xf32>, vector<64x32xf32>, vector<8x32xf32> -> vector<8x32xf32>
    %17 = vector.broadcast %8 : vector<1x32xf32> to vector<8x32xf32>
    %18 = arith.addf %16, %17 : vector<8x32xf32>
    %19 = math.tanh %18 : vector<8x32xf32>
    %20 = vector.extract_strided_slice %5 {offsets = [8, 0], sizes = [8, 32], strides = [1, 1]} : vector<64x32xf32> to vector<8x32xf32>
    %cst_15 = arith.constant dense<0.000000e+00> : vector<8x32xf32>
    %21 = tpu.matmul %14, %6, %cst_15 {dimension_numbers = #tpu.dot_dimension_numbers<[1], [0], [0], [1], [0, 0, 1, 1], [], []>} : vector<8x32xf32>, vector<32x32xf32>, vector<8x32xf32> -> vector<8x32xf32>
    %22 = arith.addf %20, %21 : vector<8x32xf32>
    %23 = math.tanh %22 : vector<8x32xf32>
    %24 = tpu.concatenate %23, %19 in 1 : vector<8x32xf32>, vector<8x32xf32> -> vector<8x64xf32>
    %cst_16 = arith.constant dense<0.000000e+00> : vector<8x32xf32>
    %25 = tpu.matmul %24, %7, %cst_16 {dimension_numbers = #tpu.dot_dimension_numbers<[1], [0], [0], [1], [0, 0, 1, 1], [], []>} : vector<8x64xf32>, vector<64x32xf32>, vector<8x32xf32> -> vector<8x32xf32>
    %26 = vector.broadcast %8 : vector<1x32xf32> to vector<8x32xf32>
    %27 = arith.addf %25, %26 : vector<8x32xf32>
    %28 = math.tanh %27 : vector<8x32xf32>
    %29 = vector.extract_strided_slice %5 {offsets = [16, 0], sizes = [8, 32], strides = [1, 1]} : vector<64x32xf32> to vector<8x32xf32>
    %cst_17 = arith.constant dense<0.000000e+00> : vector<8x32xf32>
    %30 = tpu.matmul %23, %6, %cst_17 {dimension_numbers = #tpu.dot_dimension_numbers<[1], [0], [0], [1], [0, 0, 1, 1], [], []>} : vector<8x32xf32>, vector<32x32xf32>, vector<8x32xf32> -> vector<8x32xf32>
    %31 = arith.addf %29, %30 : vector<8x32xf32>
    %32 = math.tanh %31 : vector<8x32xf32>
    %33 = tpu.concatenate %32, %28 in 1 : vector<8x32xf32>, vector<8x32xf32> -> vector<8x64xf32>
    %cst_18 = arith.constant dense<0.000000e+00> : vector<8x32xf32>
    %34 = tpu.matmul %33, %7, %cst_18 {dimension_numbers = #tpu.dot_dimension_numbers<[1], [0], [0], [1], [0, 0, 1, 1], [], []>} : vector<8x64xf32>, vector<64x32xf32>, vector<8x32xf32> -> vector<8x32xf32>
    %35 = vector.broadcast %8 : vector<1x32xf32> to vector<8x32xf32>
    %36 = arith.addf %34, %35 : vector<8x32xf32>
    %37 = math.tanh %36 : vector<8x32xf32>
    %38 = vector.extract_strided_slice %5 {offsets = [24, 0], sizes = [8, 32], strides = [1, 1]} : vector<64x32xf32> to vector<8x32xf32>
    %cst_19 = arith.constant dense<0.000000e+00> : vector<8x32xf32>
    %39 = tpu.matmul %32, %6, %cst_19 {dimension_numbers = #tpu.dot_dimension_numbers<[1], [0], [0], [1], [0, 0, 1, 1], [], []>} : vector<8x32xf32>, vector<32x32xf32>, vector<8x32xf32> -> vector<8x32xf32>
    %40 = arith.addf %38, %39 : vector<8x32xf32>
    %41 = math.tanh %40 : vector<8x32xf32>
    %42 = tpu.concatenate %41, %37 in 1 : vector<8x32xf32>, vector<8x32xf32> -> vector<8x64xf32>
    %cst_20 = arith.constant dense<0.000000e+00> : vector<8x32xf32>
    %43 = tpu.matmul %42, %7, %cst_20 {dimension_numbers = #tpu.dot_dimension_numbers<[1], [0], [0], [1], [0, 0, 1, 1], [], []>} : vector<8x64xf32>, vector<64x32xf32>, vector<8x32xf32> -> vector<8x32xf32>
    %44 = vector.broadcast %8 : vector<1x32xf32> to vector<8x32xf32>
    %45 = arith.addf %43, %44 : vector<8x32xf32>
    %46 = math.tanh %45 : vector<8x32xf32>
    %47 = vector.extract_strided_slice %5 {offsets = [32, 0], sizes = [8, 32], strides = [1, 1]} : vector<64x32xf32> to vector<8x32xf32>
    %cst_21 = arith.constant dense<0.000000e+00> : vector<8x32xf32>
    %48 = tpu.matmul %41, %6, %cst_21 {dimension_numbers = #tpu.dot_dimension_numbers<[1], [0], [0], [1], [0, 0, 1, 1], [], []>} : vector<8x32xf32>, vector<32x32xf32>, vector<8x32xf32> -> vector<8x32xf32>
    %49 = arith.addf %47, %48 : vector<8x32xf32>
    %50 = math.tanh %49 : vector<8x32xf32>
    %51 = tpu.concatenate %50, %46 in 1 : vector<8x32xf32>, vector<8x32xf32> -> vector<8x64xf32>
    %cst_22 = arith.constant dense<0.000000e+00> : vector<8x32xf32>
    %52 = tpu.matmul %51, %7, %cst_22 {dimension_numbers = #tpu.dot_dimension_numbers<[1], [0], [0], [1], [0, 0, 1, 1], [], []>} : vector<8x64xf32>, vector<64x32xf32>, vector<8x32xf32> -> vector<8x32xf32>
    %53 = vector.broadcast %8 : vector<1x32xf32> to vector<8x32xf32>
    %54 = arith.addf %52, %53 : vector<8x32xf32>
    %55 = math.tanh %54 : vector<8x32xf32>
    %56 = vector.extract_strided_slice %5 {offsets = [40, 0], sizes = [8, 32], strides = [1, 1]} : vector<64x32xf32> to vector<8x32xf32>
    %cst_23 = arith.constant dense<0.000000e+00> : vector<8x32xf32>
    %57 = tpu.matmul %50, %6, %cst_23 {dimension_numbers = #tpu.dot_dimension_numbers<[1], [0], [0], [1], [0, 0, 1, 1], [], []>} : vector<8x32xf32>, vector<32x32xf32>, vector<8x32xf32> -> vector<8x32xf32>
    %58 = arith.addf %56, %57 : vector<8x32xf32>
    %59 = math.tanh %58 : vector<8x32xf32>
    %60 = tpu.concatenate %59, %55 in 1 : vector<8x32xf32>, vector<8x32xf32> -> vector<8x64xf32>
    %cst_24 = arith.constant dense<0.000000e+00> : vector<8x32xf32>
    %61 = tpu.matmul %60, %7, %cst_24 {dimension_numbers = #tpu.dot_dimension_numbers<[1], [0], [0], [1], [0, 0, 1, 1], [], []>} : vector<8x64xf32>, vector<64x32xf32>, vector<8x32xf32> -> vector<8x32xf32>
    %62 = vector.broadcast %8 : vector<1x32xf32> to vector<8x32xf32>
    %63 = arith.addf %61, %62 : vector<8x32xf32>
    %64 = math.tanh %63 : vector<8x32xf32>
    %65 = vector.extract_strided_slice %5 {offsets = [48, 0], sizes = [8, 32], strides = [1, 1]} : vector<64x32xf32> to vector<8x32xf32>
    %cst_25 = arith.constant dense<0.000000e+00> : vector<8x32xf32>
    %66 = tpu.matmul %59, %6, %cst_25 {dimension_numbers = #tpu.dot_dimension_numbers<[1], [0], [0], [1], [0, 0, 1, 1], [], []>} : vector<8x32xf32>, vector<32x32xf32>, vector<8x32xf32> -> vector<8x32xf32>
    %67 = arith.addf %65, %66 : vector<8x32xf32>
    %68 = math.tanh %67 : vector<8x32xf32>
    %69 = tpu.concatenate %68, %64 in 1 : vector<8x32xf32>, vector<8x32xf32> -> vector<8x64xf32>
    %cst_26 = arith.constant dense<0.000000e+00> : vector<8x32xf32>
    %70 = tpu.matmul %69, %7, %cst_26 {dimension_numbers = #tpu.dot_dimension_numbers<[1], [0], [0], [1], [0, 0, 1, 1], [], []>} : vector<8x64xf32>, vector<64x32xf32>, vector<8x32xf32> -> vector<8x32xf32>
    %71 = vector.broadcast %8 : vector<1x32xf32> to vector<8x32xf32>
    %72 = arith.addf %70, %71 : vector<8x32xf32>
    %73 = math.tanh %72 : vector<8x32xf32>
    %74 = vector.extract_strided_slice %5 {offsets = [56, 0], sizes = [8, 32], strides = [1, 1]} : vector<64x32xf32> to vector<8x32xf32>
    %cst_27 = arith.constant dense<0.000000e+00> : vector<8x32xf32>
    %75 = tpu.matmul %68, %6, %cst_27 {dimension_numbers = #tpu.dot_dimension_numbers<[1], [0], [0], [1], [0, 0, 1, 1], [], []>} : vector<8x32xf32>, vector<32x32xf32>, vector<8x32xf32> -> vector<8x32xf32>
    %76 = arith.addf %74, %75 : vector<8x32xf32>
    %77 = math.tanh %76 : vector<8x32xf32>
    %78 = tpu.concatenate %77, %73 in 1 : vector<8x32xf32>, vector<8x32xf32> -> vector<8x64xf32>
    %cst_28 = arith.constant dense<0.000000e+00> : vector<8x32xf32>
    %79 = tpu.matmul %78, %7, %cst_28 {dimension_numbers = #tpu.dot_dimension_numbers<[1], [0], [0], [1], [0, 0, 1, 1], [], []>} : vector<8x64xf32>, vector<64x32xf32>, vector<8x32xf32> -> vector<8x32xf32>
    %80 = vector.broadcast %8 : vector<1x32xf32> to vector<8x32xf32>
    %81 = arith.addf %79, %80 : vector<8x32xf32>
    %82 = math.tanh %81 : vector<8x32xf32>
    %c0_29 = arith.constant 0 : index
    %c0_30 = arith.constant 0 : index
    %83 = vector.load %arg7[%c0_29, %c0_30] : memref<32x128xf32, #tpu.memory_space<vmem>>, vector<32x128xf32>
    %cst_31 = arith.constant dense<0.000000e+00> : vector<8x128xf32>
    %84 = tpu.matmul %82, %83, %cst_31 {dimension_numbers = #tpu.dot_dimension_numbers<[1], [0], [0], [1], [0, 0, 1, 1], [], []>} : vector<8x32xf32>, vector<32x128xf32>, vector<8x128xf32> -> vector<8x128xf32>
    %c0_32 = arith.constant 0 : index
    %c0_33 = arith.constant 0 : index
    %85 = vector.load %arg8[%c0_32, %c0_33] : memref<1x128xf32, #tpu.memory_space<vmem>>, vector<1x128xf32>
    %86 = vector.broadcast %85 : vector<1x128xf32> to vector<8x128xf32>
    %87 = arith.addf %84, %86 : vector<8x128xf32>
    %c0_34 = arith.constant 0 : index
    %c0_35 = arith.constant 0 : index
    %88 = vector.load %arg9[%c0_34, %c0_35] : memref<8x128xf32, #tpu.memory_space<vmem>>, vector<8x128xf32>
    tpu.vector_store %arg9[%c0_34, %c0_35], %87 {strides = array<i32>} : memref<8x128xf32, #tpu.memory_space<vmem>>, vector<8x128xf32>,
    %c0_36 = arith.constant 0 : index
    %c0_37 = arith.constant 0 : index
    %c0_38 = arith.constant 0 : index
    %89 = vector.load %arg10[%c0_36, %c0_37, %c0_38] : memref<2x8x32xf32, #tpu.memory_space<vmem>>, vector<1x8x32xf32>
    %90 = vector.shape_cast %89 : vector<1x8x32xf32> to vector<8x32xf32>
    %91 = vector.shape_cast %77 : vector<8x32xf32> to vector<1x8x32xf32>
    tpu.vector_store %arg10[%c0_36, %c0_37, %c0_38], %91 {strides = array<i32>} : memref<2x8x32xf32, #tpu.memory_space<vmem>>, vector<1x8x32xf32>,
    %c1 = arith.constant 1 : index
    %c0_39 = arith.constant 0 : index
    %c0_40 = arith.constant 0 : index
    %92 = vector.load %arg10[%c1, %c0_39, %c0_40] : memref<2x8x32xf32, #tpu.memory_space<vmem>>, vector<1x8x32xf32>
    %93 = vector.shape_cast %92 : vector<1x8x32xf32> to vector<8x32xf32>
    %94 = vector.shape_cast %82 : vector<8x32xf32> to vector<1x8x32xf32>
    tpu.vector_store %arg10[%c1, %c0_39, %c0_40], %94 {strides = array<i32>} : memref<2x8x32xf32, #tpu.memory_space<vmem>>, vector<1x8x32xf32>,
    return
  }
  func.func @transform_0(%arg0: i32) -> (i32, i32) {
    %c0_i32 = arith.constant 0 : i32
    %c0_i32_0 = arith.constant 0 : i32
    %c0_i32_1 = arith.constant 0 : i32
    return %c0_i32, %c0_i32_0 : i32, i32
  }
  func.func @transform_1(%arg0: i32) -> (i32, i32) {
    %c0_i32 = arith.constant 0 : i32
    %c0_i32_0 = arith.constant 0 : i32
    %c0_i32_1 = arith.constant 0 : i32
    return %c0_i32, %c0_i32_0 : i32, i32
  }
  func.func @transform_2(%arg0: i32) -> (i32, i32) {
    %c0_i32 = arith.constant 0 : i32
    %c0_i32_0 = arith.constant 0 : i32
    %c0_i32_1 = arith.constant 0 : i32
    return %c0_i32, %c0_i32_0 : i32, i32
  }
  func.func @transform_3(%arg0: i32) -> (i32, i32) {
    %c0_i32 = arith.constant 0 : i32
    %c0_i32_0 = arith.constant 0 : i32
    %c0_i32_1 = arith.constant 0 : i32
    return %c0_i32, %c0_i32_0 : i32, i32
  }
  func.func @transform_4(%arg0: i32) -> (i32, i32) {
    %c0_i32 = arith.constant 0 : i32
    %c0_i32_0 = arith.constant 0 : i32
    %c0_i32_1 = arith.constant 0 : i32
    return %c0_i32, %c0_i32_0 : i32, i32
  }
  func.func @transform_5(%arg0: i32) -> (i32, i32) {
    %c0_i32 = arith.constant 0 : i32
    %c0_i32_0 = arith.constant 0 : i32
    %c0_i32_1 = arith.constant 0 : i32
    return %c0_i32, %c0_i32_0 : i32, i32
  }
  func.func @transform_6(%arg0: i32) -> (i32, i32) {
    %c0_i32 = arith.constant 0 : i32
    %c0_i32_0 = arith.constant 0 : i32
    %c0_i32_1 = arith.constant 0 : i32
    return %c0_i32, %c0_i32_0 : i32, i32
  }
  func.func @transform_7(%arg0: i32) -> (i32, i32) {
    %c0_i32 = arith.constant 0 : i32
    %c0_i32_0 = arith.constant 0 : i32
    %c0_i32_1 = arith.constant 0 : i32
    return %c0_i32, %c0_i32_0 : i32, i32
  }
  func.func @transform_8(%arg0: i32) -> (i32, i32) {
    %c0_i32 = arith.constant 0 : i32
    %c0_i32_0 = arith.constant 0 : i32
    %c0_i32_1 = arith.constant 0 : i32
    return %c0_i32, %c0_i32_0 : i32, i32
  }
  func.func @transform_9(%arg0: i32) -> (i32, i32, i32) {
    %c0_i32 = arith.constant 0 : i32
    %c0_i32_0 = arith.constant 0 : i32
    %c0_i32_1 = arith.constant 0 : i32
    %c0_i32_2 = arith.constant 0 : i32
    return %c0_i32, %c0_i32_0, %c0_i32_1 : i32, i32, i32
  }
}

</mosaic_0001>

<llo_original>
// kernel: rnn_forward.1
$region0: #{rnn_forward.1}
  #allocation0 [shape = 'u32[]', space=smem, size = 0x4, offset = 0x4, fixed_abs, tag = 'smem constant byte address 0x4 - core index']
  #allocation1 [shape = 'u32[72,128]{1,0:T(1,128)}', space=vmem, size = 0x9000, scoped, tag = 'internal scratch']
  %s0 = inlined_call_operand.vmem [shape: f32[64,64], index: 0, kind: input, shape index: {}]
  %s1 = inlined_call_operand.vmem [shape: f32[64,32], index: 1, kind: input, shape index: {}]
  %s2 = inlined_call_operand.vmem [shape: f32[32,32], index: 2, kind: input, shape index: {}]
  %s3 = inlined_call_operand.vmem [shape: f32[1,32], index: 3, kind: input, shape index: {}]
  %s4 = inlined_call_operand.vmem [shape: f32[64,32], index: 4, kind: input, shape index: {}]
  %s5 = inlined_call_operand.vmem [shape: f32[1,32], index: 5, kind: input, shape index: {}]
  %s6 = inlined_call_operand.vmem [shape: f32[32,128], index: 6, kind: input, shape index: {}]
  %s7 = inlined_call_operand.vmem [shape: f32[1,128], index: 7, kind: input, shape index: {}]
  %s8 = inlined_call_operand.vmem [shape: f32[8,128], index: 8, kind: output, shape index: {0}]
  %s9 = inlined_call_operand.vmem [shape: f32[2,8,32], index: 9, kind: output, shape index: {1}]
  %10 = xla_tuple %s8, %s9
  %s11 = sld [smem:[#allocation0]]
  $region50: #{rnn_forward.1} parent=0
    _
  %s13 = ssub.s32 1, %s11
  %s14 = scalar_select 0, %s13, %s11
  // Predicated region
  $region2: #{rnn_forward.1} parent=0 // pred_check
    _
  $region3: #{rnn_forward.1} parent=0 // pred_check_branch
    %16 = sbr.rel (0) target = $region5
  $region4: #{rnn_forward.1} parent=0 // pred_region
    _
  $region5: #{rnn_forward.1} parent=0 // pred_fallthru
    _
  // Predicated region
  $region6: #{rnn_forward.1} parent=0 // pred_check
    _
  $region7: #{rnn_forward.1} parent=0 // pred_check_branch
    %18 = sbr.rel (0) target = $region9
  $region8: #{rnn_forward.1} parent=0 // pred_region
    _
  $region9: #{rnn_forward.1} parent=0 // pred_fallthru
    _
  // Predicated region
  $region10: #{rnn_forward.1} parent=0 // pred_check
    _
  $region11: #{rnn_forward.1} parent=0 // pred_check_branch
    %20 = sbr.rel (0) target = $region13
  $region12: #{rnn_forward.1} parent=0 // pred_region
    _
  $region13: #{rnn_forward.1} parent=0 // pred_fallthru
    _
  // Predicated region
  $region14: #{rnn_forward.1} parent=0 // pred_check
    _
  $region15: #{rnn_forward.1} parent=0 // pred_check_branch
    %22 = sbr.rel (0) target = $region17
  $region16: #{rnn_forward.1} parent=0 // pred_region
    _
  $region17: #{rnn_forward.1} parent=0 // pred_fallthru
    _
  // Predicated region
  $region18: #{rnn_forward.1} parent=0 // pred_check
    _
  $region19: #{rnn_forward.1} parent=0 // pred_check_branch
    %24 = sbr.rel (0) target = $region21
  $region20: #{rnn_forward.1} parent=0 // pred_region
    _
  $region21: #{rnn_forward.1} parent=0 // pred_fallthru
    _
  // Predicated region
  $region22: #{rnn_forward.1} parent=0 // pred_check
    _
  $region23: #{rnn_forward.1} parent=0 // pred_check_branch
    %26 = sbr.rel (0) target = $region25
  $region24: #{rnn_forward.1} parent=0 // pred_region
    _
  $region25: #{rnn_forward.1} parent=0 // pred_fallthru
    _
  // Predicated region
  $region26: #{rnn_forward.1} parent=0 // pred_check
    _
  $region27: #{rnn_forward.1} parent=0 // pred_check_branch
    %28 = sbr.rel (0) target = $region29
  $region28: #{rnn_forward.1} parent=0 // pred_region
    _
  $region29: #{rnn_forward.1} parent=0 // pred_fallthru
    _
  // Predicated region
  $region30: #{rnn_forward.1} parent=0 // pred_check
    _
  $region31: #{rnn_forward.1} parent=0 // pred_check_branch
    %30 = sbr.rel (0) target = $region33
  $region32: #{rnn_forward.1} parent=0 // pred_region
    _
  $region33: #{rnn_forward.1} parent=0 // pred_fallthru
    _
  %v31 = vld [vmem:[%s0] sm:$0xff]
  %v32 = vld [vmem:[%s0 + $0x8] sm:$0xff]
  %v33 = vld [vmem:[%s0 + $0x10] sm:$0xff]
  %v34 = vld [vmem:[%s0 + $0x18] sm:$0xff]
  %v35 = vld [vmem:[%s0 + $0x20] sm:$0xff]
  %v36 = vld [vmem:[%s0 + $0x28] sm:$0xff]
  %v37 = vld [vmem:[%s0 + $0x30] sm:$0xff]
  %v38 = vld [vmem:[%s0 + $0x38] sm:$0xff]
  %v39 = vld [vmem:[%s1] sm:$0xff]
  %v40 = vld [vmem:[%s1 + $0x8] sm:$0xff]
  %v41 = vld [vmem:[%s1 + $0x10] sm:$0xff]
  %v42 = vld [vmem:[%s1 + $0x18] sm:$0xff]
  %v43 = vld [vmem:[%s1 + $0x20] sm:$0xff]
  %v44 = vld [vmem:[%s1 + $0x28] sm:$0xff]
  %v45 = vld [vmem:[%s1 + $0x30] sm:$0xff]
  %v46 = vld [vmem:[%s1 + $0x38] sm:$0xff]
  %v47 = vld [vmem:[%s3] sm:$0x1]
  %v49 = vperm.slane %v47, 0
  %vm51 = vcmask 523264
  %v53 = vsel %vm51, %v31, 0
  %v56 = vsel %vm51, %v32, 0
  %v59 = vsel %vm51, %v33, 0
  %v62 = vsel %vm51, %v34, 0
  %v65 = vsel %vm51, %v35, 0
  %v68 = vsel %vm51, %v36, 0
  %v71 = vsel %vm51, %v37, 0
  %v74 = vsel %vm51, %v38, 0
  %76 = vmatpush.msra.mxu0 0.0
  %77 = vmatpush.msra.mxu0 0.0
  %78 = vmatpush.msra.mxu0 0.0
  %79 = vmatpush.msra.mxu0 0.0
  %80 = vmatpush.msra.mxu0 0.0
  %81 = vmatpush.msra.mxu0 0.0
  %82 = vmatpush.msra.mxu0 0.0
  %83 = vmatpush.msra.mxu0 0.0
  %84 = vmatpush.msra.mxu0 %v46
  %85 = vmatpush.msra.mxu0 %v45
  %86 = vmatpush.msra.mxu0 %v44
  %87 = vmatpush.msra.mxu0 %v43
  %88 = vmatpush.msra.mxu0 %v42
  %89 = vmatpush.msra.mxu0 %v41
  %90 = vmatpush.msra.mxu0 %v40
  %91 = vmatpush.msra.mxu0 %v39
  %92 = vmatmul.f32.gmra.mxu0 %v53
  %v93 = vpop.f32.mrf.mxu0
  %v94 = vadd.f32 %v49, %v93
  %95 = vmatmul.f32.gmra.mxu0 %v56
  %v96 = vpop.f32.mrf.mxu0
  %v97 = vadd.f32 %v49, %v96
  %98 = vmatmul.f32.gmra.mxu0 %v59
  %v99 = vpop.f32.mrf.mxu0
  %v100 = vadd.f32 %v49, %v99
  %101 = vmatmul.f32.gmra.mxu0 %v62
  %v102 = vpop.f32.mrf.mxu0
  %v103 = vadd.f32 %v49, %v102
  %104 = vmatmul.f32.gmra.mxu0 %v65
  %v105 = vpop.f32.mrf.mxu0
  %v106 = vadd.f32 %v49, %v105
  %107 = vmatmul.f32.gmra.mxu0 %v68
  %v108 = vpop.f32.mrf.mxu0
  %v109 = vadd.f32 %v49, %v108
  %110 = vmatmul.f32.gmra.mxu0 %v71
  %v111 = vpop.f32.mrf.mxu0
  %v112 = vadd.f32 %v49, %v111
  %113 = vmatmul.f32.gmra.mxu0 %v74
  %v114 = vpop.f32.mrf.mxu0
  %v115 = vadd.f32 %v49, %v114
  %116 = vdwg.mxu0
  %v117 = vld [vmem:[%s2] sm:$0xff]
  %v118 = vld [vmem:[%s2 + $0x8] sm:$0xff]
  %v119 = vld [vmem:[%s2 + $0x10] sm:$0xff]
  %v120 = vld [vmem:[%s2 + $0x18] sm:$0xff]
  %v121 = vld [vmem:[%s4] sm:$0xff]
  %v122 = vld [vmem:[%s4 + $0x8] sm:$0xff]
  %v123 = vld [vmem:[%s4 + $0x10] sm:$0xff]
  %v124 = vld [vmem:[%s4 + $0x18] sm:$0xff]
  %v125 = vld [vmem:[%s4 + $0x20] sm:$0xff]
  %v126 = vld [vmem:[%s4 + $0x28] sm:$0xff]
  %v127 = vld [vmem:[%s4 + $0x30] sm:$0xff]
  %v128 = vld [vmem:[%s4 + $0x38] sm:$0xff]
  %v129 = vld [vmem:[%s5] sm:$0x1]
  %vm130 = vcmask 261120
  %v132 = vsel %vm130, 0.0, 0
  %134 = vmatpush.msra.mxu0 0.0
  %135 = vmatpush.msra.mxu0 0.0
  %136 = vmatpush.msra.mxu0 0.0
  %137 = vmatpush.msra.mxu0 0.0
  %138 = vmatpush.msra.mxu0 0.0
  %139 = vmatpush.msra.mxu0 0.0
  %140 = vmatpush.msra.mxu0 0.0
  %141 = vmatpush.msra.mxu0 0.0
  %142 = vmatpush.msra.mxu0 0.0
  %143 = vmatpush.msra.mxu0 0.0
  %144 = vmatpush.msra.mxu0 0.0
  %145 = vmatpush.msra.mxu0 0.0
  %146 = vmatpush.msra.mxu0 %v120
  %147 = vmatpush.msra.mxu0 %v119
  %148 = vmatpush.msra.mxu0 %v118
  %149 = vmatpush.msra.mxu0 %v117
  %150 = vmatmul.f32.gmra.mxu0 %v132
  %v151 = vpop.f32.mrf.mxu0
  %v152 = vadd.f32 0.0, %v151
  %153 = vdwg.mxu0
  %v154 = vadd.f32 %v94, %v152
  %v155 = vtanh.pop %v154
  %v156 = vsel %vm130, %v155, 0.0
  %v158 = vperm.slane %v129, 0
  %v161 = vsel %vm51, %v156, 0
  %163 = vmatpush.msra.mxu0 0.0
  %164 = vmatpush.msra.mxu0 0.0
  %165 = vmatpush.msra.mxu0 0.0
  %166 = vmatpush.msra.mxu0 0.0
  %167 = vmatpush.msra.mxu0 0.0
  %168 = vmatpush.msra.mxu0 0.0
  %169 = vmatpush.msra.mxu0 0.0
  %170 = vmatpush.msra.mxu0 0.0
  %171 = vmatpush.msra.mxu0 %v128
  %172 = vmatpush.msra.mxu0 %v127
  %173 = vmatpush.msra.mxu0 %v126
  %174 = vmatpush.msra.mxu0 %v125
  %175 = vmatpush.msra.mxu0 %v124
  %176 = vmatpush.msra.mxu0 %v123
  %177 = vmatpush.msra.mxu0 %v122
  %178 = vmatpush.msra.mxu0 %v121
  %179 = vmatmul.f32.gmra.mxu0 %v161
  %v180 = vpop.f32.mrf.mxu0
  %v181 = vadd.f32 %v158, %v180
  %182 = vdwg.mxu0
  %v183 = vtanh.pop %v181
  %v185 = vsel %vm130, %v155, 0
  %187 = vmatpush.msra.mxu0 0.0
  %188 = vmatpush.msra.mxu0 0.0
  %189 = vmatpush.msra.mxu0 0.0
  %190 = vmatpush.msra.mxu0 0.0
  %191 = vmatpush.msra.mxu0 0.0
  %192 = vmatpush.msra.mxu0 0.0
  %193 = vmatpush.msra.mxu0 0.0
  %194 = vmatpush.msra.mxu0 0.0
  %195 = vmatpush.msra.mxu0 0.0
  %196 = vmatpush.msra.mxu0 0.0
  %197 = vmatpush.msra.mxu0 0.0
  %198 = vmatpush.msra.mxu0 0.0
  %199 = vmatpush.msra.mxu0 %v120
  %200 = vmatpush.msra.mxu0 %v119
  %201 = vmatpush.msra.mxu0 %v118
  %202 = vmatpush.msra.mxu0 %v117
  %203 = vmatmul.f32.gmra.mxu0 %v185
  %v204 = vpop.f32.mrf.mxu0
  %v205 = vadd.f32 0.0, %v204
  %206 = vdwg.mxu0
  %v207 = vadd.f32 %v97, %v205
  %v208 = vtanh.pop %v207
  %210 = vrot.lane.b32.xlu0 %v183, 32
  %v211 = vpop.permute.xlu0 %210
  %v213 = vsel %vm130, %v208, %v211
  %v215 = vsel %vm51, %v213, 0
  %217 = vmatpush.msra.mxu0 0.0
  %218 = vmatpush.msra.mxu0 0.0
  %219 = vmatpush.msra.mxu0 0.0
  %220 = vmatpush.msra.mxu0 0.0
  %221 = vmatpush.msra.mxu0 0.0
  %222 = vmatpush.msra.mxu0 0.0
  %223 = vmatpush.msra.mxu0 0.0
  %224 = vmatpush.msra.mxu0 0.0
  %225 = vmatpush.msra.mxu0 %v128
  %226 = vmatpush.msra.mxu0 %v127
  %227 = vmatpush.msra.mxu0 %v126
  %228 = vmatpush.msra.mxu0 %v125
  %229 = vmatpush.msra.mxu0 %v124
  %230 = vmatpush.msra.mxu0 %v123
  %231 = vmatpush.msra.mxu0 %v122
  %232 = vmatpush.msra.mxu0 %v121
  %233 = vmatmul.f32.gmra.mxu0 %v215
  %v234 = vpop.f32.mrf.mxu0
  %v235 = vadd.f32 %v158, %v234
  %236 = vdwg.mxu0
  %v237 = vtanh.pop %v235
  %v239 = vsel %vm130, %v208, 0
  %241 = vmatpush.msra.mxu0 0.0
  %242 = vmatpush.msra.mxu0 0.0
  %243 = vmatpush.msra.mxu0 0.0
  %244 = vmatpush.msra.mxu0 0.0
  %245 = vmatpush.msra.mxu0 0.0
  %246 = vmatpush.msra.mxu0 0.0
  %247 = vmatpush.msra.mxu0 0.0
  %248 = vmatpush.msra.mxu0 0.0
  %249 = vmatpush.msra.mxu0 0.0
  %250 = vmatpush.msra.mxu0 0.0
  %251 = vmatpush.msra.mxu0 0.0
  %252 = vmatpush.msra.mxu0 0.0
  %253 = vmatpush.msra.mxu0 %v120
  %254 = vmatpush.msra.mxu0 %v119
  %255 = vmatpush.msra.mxu0 %v118
  %256 = vmatpush.msra.mxu0 %v117
  %257 = vmatmul.f32.gmra.mxu0 %v239
  %v258 = vpop.f32.mrf.mxu0
  %v259 = vadd.f32 0.0, %v258
  %260 = vdwg.mxu0
  %v261 = vadd.f32 %v100, %v259
  %v262 = vtanh.pop %v261
  %264 = vrot.lane.b32.xlu0 %v237, 32
  %v265 = vpop.permute.xlu0 %264
  %v267 = vsel %vm130, %v262, %v265
  %v269 = vsel %vm51, %v267, 0
  %271 = vmatpush.msra.mxu0 0.0
  %272 = vmatpush.msra.mxu0 0.0
  %273 = vmatpush.msra.mxu0 0.0
  %274 = vmatpush.msra.mxu0 0.0
  %275 = vmatpush.msra.mxu0 0.0
  %276 = vmatpush.msra.mxu0 0.0
  %277 = vmatpush.msra.mxu0 0.0
  %278 = vmatpush.msra.mxu0 0.0
  %279 = vmatpush.msra.mxu0 %v128
  %280 = vmatpush.msra.mxu0 %v127
  %281 = vmatpush.msra.mxu0 %v126
  %282 = vmatpush.msra.mxu0 %v125
  %283 = vmatpush.msra.mxu0 %v124
  %284 = vmatpush.msra.mxu0 %v123
  %285 = vmatpush.msra.mxu0 %v122
  %286 = vmatpush.msra.mxu0 %v121
  %287 = vmatmul.f32.gmra.mxu0 %v269
  %v288 = vpop.f32.mrf.mxu0
  %v289 = vadd.f32 %v158, %v288
  %290 = vdwg.mxu0
  %v291 = vtanh.pop %v289
  %v293 = vsel %vm130, %v262, 0
  %295 = vmatpush.msra.mxu0 0.0
  %296 = vmatpush.msra.mxu0 0.0
  %297 = vmatpush.msra.mxu0 0.0
  %298 = vmatpush.msra.mxu0 0.0
  %299 = vmatpush.msra.mxu0 0.0
  %300 = vmatpush.msra.mxu0 0.0
  %301 = vmatpush.msra.mxu0 0.0
  %302 = vmatpush.msra.mxu0 0.0
  %303 = vmatpush.msra.mxu0 0.0
  %304 = vmatpush.msra.mxu0 0.0
  %305 = vmatpush.msra.mxu0 0.0
  %306 = vmatpush.msra.mxu0 0.0
  %307 = vmatpush.msra.mxu0 %v120
  %308 = vmatpush.msra.mxu0 %v119
  %309 = vmatpush.msra.mxu0 %v118
  %310 = vmatpush.msra.mxu0 %v117
  %311 = vmatmul.f32.gmra.mxu0 %v293
  %v312 = vpop.f32.mrf.mxu0
  %v313 = vadd.f32 0.0, %v312
  %314 = vdwg.mxu0
  %v315 = vadd.f32 %v103, %v313
  %v316 = vtanh.pop %v315
  %318 = vrot.lane.b32.xlu0 %v291, 32
  %v319 = vpop.permute.xlu0 %318
  %v321 = vsel %vm130, %v316, %v319
  %v323 = vsel %vm51, %v321, 0
  %325 = vmatpush.msra.mxu0 0.0
  %326 = vmatpush.msra.mxu0 0.0
  %327 = vmatpush.msra.mxu0 0.0
  %328 = vmatpush.msra.mxu0 0.0
  %329 = vmatpush.msra.mxu0 0.0
  %330 = vmatpush.msra.mxu0 0.0
  %331 = vmatpush.msra.mxu0 0.0
  %332 = vmatpush.msra.mxu0 0.0
  %333 = vmatpush.msra.mxu0 %v128
  %334 = vmatpush.msra.mxu0 %v127
  %335 = vmatpush.msra.mxu0 %v126
  %336 = vmatpush.msra.mxu0 %v125
  %337 = vmatpush.msra.mxu0 %v124
  %338 = vmatpush.msra.mxu0 %v123
  %339 = vmatpush.msra.mxu0 %v122
  %340 = vmatpush.msra.mxu0 %v121
  %341 = vmatmul.f32.gmra.mxu0 %v323
  %v342 = vpop.f32.mrf.mxu0
  %v343 = vadd.f32 %v158, %v342
  %344 = vdwg.mxu0
  %v345 = vtanh.pop %v343
  %v347 = vsel %vm130, %v316, 0
  %349 = vmatpush.msra.mxu0 0.0
  %350 = vmatpush.msra.mxu0 0.0
  %351 = vmatpush.msra.mxu0 0.0
  %352 = vmatpush.msra.mxu0 0.0
  %353 = vmatpush.msra.mxu0 0.0
  %354 = vmatpush.msra.mxu0 0.0
  %355 = vmatpush.msra.mxu0 0.0
  %356 = vmatpush.msra.mxu0 0.0
  %357 = vmatpush.msra.mxu0 0.0
  %358 = vmatpush.msra.mxu0 0.0
  %359 = vmatpush.msra.mxu0 0.0
  %360 = vmatpush.msra.mxu0 0.0
  %361 = vmatpush.msra.mxu0 %v120
  %362 = vmatpush.msra.mxu0 %v119
  %363 = vmatpush.msra.mxu0 %v118
  %364 = vmatpush.msra.mxu0 %v117
  %365 = vmatmul.f32.gmra.mxu0 %v347
  %v366 = vpop.f32.mrf.mxu0
  %v367 = vadd.f32 0.0, %v366
  %368 = vdwg.mxu0
  %v369 = vadd.f32 %v106, %v367
  %v370 = vtanh.pop %v369
  %372 = vrot.lane.b32.xlu0 %v345, 32
  %v373 = vpop.permute.xlu0 %372
  %v375 = vsel %vm130, %v370, %v373
  %v377 = vsel %vm51, %v375, 0
  %379 = vmatpush.msra.mxu0 0.0
  %380 = vmatpush.msra.mxu0 0.0
  %381 = vmatpush.msra.mxu0 0.0
  %382 = vmatpush.msra.mxu0 0.0
  %383 = vmatpush.msra.mxu0 0.0
  %384 = vmatpush.msra.mxu0 0.0
  %385 = vmatpush.msra.mxu0 0.0
  %386 = vmatpush.msra.mxu0 0.0
  %387 = vmatpush.msra.mxu0 %v128
  %388 = vmatpush.msra.mxu0 %v127
  %389 = vmatpush.msra.mxu0 %v126
  %390 = vmatpush.msra.mxu0 %v125
  %391 = vmatpush.msra.mxu0 %v124
  %392 = vmatpush.msra.mxu0 %v123
  %393 = vmatpush.msra.mxu0 %v122
  %394 = vmatpush.msra.mxu0 %v121
  %395 = vmatmul.f32.gmra.mxu0 %v377
  %v396 = vpop.f32.mrf.mxu0
  %v397 = vadd.f32 %v158, %v396
  %398 = vdwg.mxu0
  %v399 = vtanh.pop %v397
  %v401 = vsel %vm130, %v370, 0
  %403 = vmatpush.msra.mxu0 0.0
  %404 = vmatpush.msra.mxu0 0.0
  %405 = vmatpush.msra.mxu0 0.0
  %406 = vmatpush.msra.mxu0 0.0
  %407 = vmatpush.msra.mxu0 0.0
  %408 = vmatpush.msra.mxu0 0.0
  %409 = vmatpush.msra.mxu0 0.0
  %410 = vmatpush.msra.mxu0 0.0
  %411 = vmatpush.msra.mxu0 0.0
  %412 = vmatpush.msra.mxu0 0.0
  %413 = vmatpush.msra.mxu0 0.0
  %414 = vmatpush.msra.mxu0 0.0
  %415 = vmatpush.msra.mxu0 %v120
  %416 = vmatpush.msra.mxu0 %v119
  %417 = vmatpush.msra.mxu0 %v118
  %418 = vmatpush.msra.mxu0 %v117
  %419 = vmatmul.f32.gmra.mxu0 %v401
  %v420 = vpop.f32.mrf.mxu0
  %v421 = vadd.f32 0.0, %v420
  %422 = vdwg.mxu0
  %v423 = vadd.f32 %v109, %v421
  %v424 = vtanh.pop %v423
  %426 = vrot.lane.b32.xlu0 %v399, 32
  %v427 = vpop.permute.xlu0 %426
  %v429 = vsel %vm130, %v424, %v427
  %v431 = vsel %vm51, %v429, 0
  %433 = vmatpush.msra.mxu0 0.0
  %434 = vmatpush.msra.mxu0 0.0
  %435 = vmatpush.msra.mxu0 0.0
  %436 = vmatpush.msra.mxu0 0.0
  %437 = vmatpush.msra.mxu0 0.0
  %438 = vmatpush.msra.mxu0 0.0
  %439 = vmatpush.msra.mxu0 0.0
  %440 = vmatpush.msra.mxu0 0.0
  %441 = vmatpush.msra.mxu0 %v128
  %442 = vmatpush.msra.mxu0 %v127
  %443 = vmatpush.msra.mxu0 %v126
  %444 = vmatpush.msra.mxu0 %v125
  %445 = vmatpush.msra.mxu0 %v124
  %446 = vmatpush.msra.mxu0 %v123
  %447 = vmatpush.msra.mxu0 %v122
  %448 = vmatpush.msra.mxu0 %v121
  %449 = vmatmul.f32.gmra.mxu0 %v431
  %v450 = vpop.f32.mrf.mxu0
  %v451 = vadd.f32 %v158, %v450
  %452 = vdwg.mxu0
  %v453 = vtanh.pop %v451
  %v455 = vsel %vm130, %v424, 0
  %457 = vmatpush.msra.mxu0 0.0
  %458 = vmatpush.msra.mxu0 0.0
  %459 = vmatpush.msra.mxu0 0.0
  %460 = vmatpush.msra.mxu0 0.0
  %461 = vmatpush.msra.mxu0 0.0
  %462 = vmatpush.msra.mxu0 0.0
  %463 = vmatpush.msra.mxu0 0.0
  %464 = vmatpush.msra.mxu0 0.0
  %465 = vmatpush.msra.mxu0 0.0
  %466 = vmatpush.msra.mxu0 0.0
  %467 = vmatpush.msra.mxu0 0.0
  %468 = vmatpush.msra.mxu0 0.0
  %469 = vmatpush.msra.mxu0 %v120
  %470 = vmatpush.msra.mxu0 %v119
  %471 = vmatpush.msra.mxu0 %v118
  %472 = vmatpush.msra.mxu0 %v117
  %473 = vmatmul.f32.gmra.mxu0 %v455
  %v474 = vpop.f32.mrf.mxu0
  %v475 = vadd.f32 0.0, %v474
  %476 = vdwg.mxu0
  %v477 = vadd.f32 %v112, %v475
  %v478 = vtanh.pop %v477
  %480 = vrot.lane.b32.xlu0 %v453, 32
  %v481 = vpop.permute.xlu0 %480
  %v483 = vsel %vm130, %v478, %v481
  %v485 = vsel %vm51, %v483, 0
  %487 = vmatpush.msra.mxu0 0.0
  %488 = vmatpush.msra.mxu0 0.0
  %489 = vmatpush.msra.mxu0 0.0
  %490 = vmatpush.msra.mxu0 0.0
  %491 = vmatpush.msra.mxu0 0.0
  %492 = vmatpush.msra.mxu0 0.0
  %493 = vmatpush.msra.mxu0 0.0
  %494 = vmatpush.msra.mxu0 0.0
  %495 = vmatpush.msra.mxu0 %v128
  %496 = vmatpush.msra.mxu0 %v127
  %497 = vmatpush.msra.mxu0 %v126
  %498 = vmatpush.msra.mxu0 %v125
  %499 = vmatpush.msra.mxu0 %v124
  %500 = vmatpush.msra.mxu0 %v123
  %501 = vmatpush.msra.mxu0 %v122
  %502 = vmatpush.msra.mxu0 %v121
  %503 = vmatmul.f32.gmra.mxu0 %v485
  %v504 = vpop.f32.mrf.mxu0
  %v505 = vadd.f32 %v158, %v504
  %506 = vdwg.mxu0
  %v507 = vtanh.pop %v505
  %v509 = vsel %vm130, %v478, 0
  %511 = vmatpush.msra.mxu0 0.0
  %512 = vmatpush.msra.mxu0 0.0
  %513 = vmatpush.msra.mxu0 0.0
  %514 = vmatpush.msra.mxu0 0.0
  %515 = vmatpush.msra.mxu0 0.0
  %516 = vmatpush.msra.mxu0 0.0
  %517 = vmatpush.msra.mxu0 0.0
  %518 = vmatpush.msra.mxu0 0.0
  %519 = vmatpush.msra.mxu0 0.0
  %520 = vmatpush.msra.mxu0 0.0
  %521 = vmatpush.msra.mxu0 0.0
  %522 = vmatpush.msra.mxu0 0.0
  %523 = vmatpush.msra.mxu0 %v120
  %524 = vmatpush.msra.mxu0 %v119
  %525 = vmatpush.msra.mxu0 %v118
  %526 = vmatpush.msra.mxu0 %v117
  %527 = vmatmul.f32.gmra.mxu0 %v509
  %v528 = vpop.f32.mrf.mxu0
  %v529 = vadd.f32 0.0, %v528
  %530 = vdwg.mxu0
  %v531 = vadd.f32 %v115, %v529
  %v532 = vtanh.pop %v531
  %534 = vrot.lane.b32.xlu0 %v507, 32
  %v535 = vpop.permute.xlu0 %534
  %v537 = vsel %vm130, %v532, %v535
  %v539 = vsel %vm51, %v537, 0
  %541 = vmatpush.msra.mxu0 0.0
  %542 = vmatpush.msra.mxu0 0.0
  %543 = vmatpush.msra.mxu0 0.0
  %544 = vmatpush.msra.mxu0 0.0
  %545 = vmatpush.msra.mxu0 0.0
  %546 = vmatpush.msra.mxu0 0.0
  %547 = vmatpush.msra.mxu0 0.0
  %548 = vmatpush.msra.mxu0 0.0
  %549 = vmatpush.msra.mxu0 %v128
  %550 = vmatpush.msra.mxu0 %v127
  %551 = vmatpush.msra.mxu0 %v126
  %552 = vmatpush.msra.mxu0 %v125
  %553 = vmatpush.msra.mxu0 %v124
  %554 = vmatpush.msra.mxu0 %v123
  %555 = vmatpush.msra.mxu0 %v122
  %556 = vmatpush.msra.mxu0 %v121
  %557 = vmatmul.f32.gmra.mxu0 %v539
  %v558 = vpop.f32.mrf.mxu0
  %v559 = vadd.f32 %v158, %v558
  %560 = vdwg.mxu0
  %v561 = vtanh.pop %v559
  %v562 = vld [vmem:[%s6] sm:$0xff]
  %v563 = vld [vmem:[%s6 + $0x8] sm:$0xff]
  %v564 = vld [vmem:[%s6 + $0x10] sm:$0xff]
  %v565 = vld [vmem:[%s6 + $0x18] sm:$0xff]
  %v566 = vld [vmem:[%s7] sm:$0x1]
  %v568 = vperm.slane %v566, 0
  %v571 = vsel %vm130, %v561, 0
  %573 = vmatpush.msra.mxu0 0.0
  %574 = vmatpush.msra.mxu0 0.0
  %575 = vmatpush.msra.mxu0 0.0
  %576 = vmatpush.msra.mxu0 0.0
  %577 = vmatpush.msra.mxu0 0.0
  %578 = vmatpush.msra.mxu0 0.0
  %579 = vmatpush.msra.mxu0 0.0
  %580 = vmatpush.msra.mxu0 0.0
  %581 = vmatpush.msra.mxu0 0.0
  %582 = vmatpush.msra.mxu0 0.0
  %583 = vmatpush.msra.mxu0 0.0
  %584 = vmatpush.msra.mxu0 0.0
  %585 = vmatpush.msra.mxu0 %v565
  %586 = vmatpush.msra.mxu0 %v564
  %587 = vmatpush.msra.mxu0 %v563
  %588 = vmatpush.msra.mxu0 %v562
  %589 = vmatmul.f32.gmra.mxu0 %v571
  %v590 = vpop.f32.mrf.mxu0
  %v591 = vadd.f32 %v568, %v590
  %592 = vdwg.mxu0
  %593 = vst [vmem:[%s8] sm:$0xff] %v591
  %594 = vst.msk [vmem:[%s9] sm:$0xff] %vm130, %v532
  %s595 = scalar_lea.vmem %s9, 8
  %596 = vst.msk [vmem:[%s595] sm:$0xff] %vm130, %v561
  // Predicated region
  $region34: #{rnn_forward.1} parent=0 // pred_check
    _
  $region35: #{rnn_forward.1} parent=0 // pred_check_branch
    %598 = sbr.rel (0) target = $region37
  $region36: #{rnn_forward.1} parent=0 // pred_region
    _
  $region37: #{rnn_forward.1} parent=0 // pred_fallthru
    _
  // Predicated region
  $region38: #{rnn_forward.1} parent=0 // pred_check
    _
  $region39: #{rnn_forward.1} parent=0 // pred_check_branch
    %600 = sbr.rel (0) target = $region41
  $region40: #{rnn_forward.1} parent=0 // pred_region
    _
  $region41: #{rnn_forward.1} parent=0 // pred_fallthru
    _
  // Predicated region
  $region42: #{rnn_forward.1} parent=0 // pred_check
    _
  $region43: #{rnn_forward.1} parent=0 // pred_check_branch
    %602 = sbr.rel (0) target = $region45
  $region44: #{rnn_forward.1} parent=0 // pred_region
    _
  $region45: #{rnn_forward.1} parent=0 // pred_fallthru
    _
  // Predicated region
  $region46: #{rnn_forward.1} parent=0 // pred_check
    _
  $region47: #{rnn_forward.1} parent=0 // pred_check_branch
    %604 = sbr.rel (0) target = $region49
  $region48: #{rnn_forward.1} parent=0 // pred_region
    _
  $region49: #{rnn_forward.1} parent=0 // pred_fallthru
    _

</llo_original>
